<compile_context>
chip_gen: v5e
topology: v5e:2x2
jax: 0.10.0
libtpu: 0.0.40
codegen_flags: <defaults>
</compile_context>

<pallas_src>
import jax
import jax.numpy as jnp
from jax.experimental import pallas as pl
from jax.experimental.pallas import tpu as pltpu


def _linear_sigmoid_kernel(w_ref, b_ref, xT_ref, oT_ref):
    # w_ref:  SMEM (out_f, in_f)  -- scalar reads
    # b_ref:  SMEM (out_f,)       -- scalar reads
    # xT_ref: VMEM (in_f,  TN)    -- batch on the lane axis
    # oT_ref: VMEM (out_f, TN)
    in_f = xT_ref.shape[0]
    out_f = oT_ref.shape[0]

    rows = []
    for o in range(out_f):                      # out_f = 2, fully unrolled
        y = w_ref[o, 0] * xT_ref[pl.ds(0, 1), :]          # (1, TN) VPU FMA chain
        for k in range(1, in_f):                # in_f = 2
            y = y + w_ref[o, k] * xT_ref[pl.ds(k, 1), :]
        y = y + b_ref[o]
        rows.append(jax.nn.sigmoid(y))          # exp on EUP, rest on VPU
    # Single full-block, lane-dense store.
    oT_ref[...] = jnp.concatenate(rows, axis=0).astype(oT_ref.dtype)


def net_forward(x, w, b, *, tn=2048):
    """sigmoid(x @ w.T + b) via a lane-dense Pallas TPU kernel.

    x: (N, 2) float32
    w: (2, 2) float32  (out_features, in_features) — PyTorch layout, used as-is
    b: (2,)   float32
    returns (N, 2) float32
    """
    n, in_f = x.shape
    out_f = w.shape[0]

    n_blocks = pl.cdiv(n, tn)
    n_pad = n_blocks * tn

    # Lane-dense layout: batch -> lanes (last dim), padded to a tile multiple.
    xT = jnp.pad(x.T, ((0, 0), (0, n_pad - n)))           # (in_f, N_pad)

    oT = pl.pallas_call(
        _linear_sigmoid_kernel,
        out_shape=jax.ShapeDtypeStruct((out_f, n_pad), jnp.float32),
        grid=(n_blocks,),
        in_specs=[
            pl.BlockSpec(memory_space=pltpu.MemorySpace.SMEM),   # w (scalars)
            pl.BlockSpec(memory_space=pltpu.MemorySpace.SMEM),   # b (scalars)
            pl.BlockSpec((in_f, tn), lambda i: (0, i)),          # xT tile
        ],
        out_specs=pl.BlockSpec((out_f, tn), lambda i: (0, i)),
        compiler_params=pltpu.CompilerParams(
            dimension_semantics=("parallel",),
        ),
    )(w, b, xT)

    return oT[:, :n].T                                     # back to (N, out_f)


if __name__ == "__main__":
    key = jax.random.PRNGKey(0)
    kx0, kx1, kw, kb = jax.random.split(key, 4)

    # Small version of the module's data: two Gaussian clusters around +/-4.
    N_HALF, IN_F, OUT_F = 250, 2, 2
    data0 = 4.0 + 2.0 * jax.random.normal(kx0, (N_HALF, IN_F), jnp.float32)
    data1 = -4.0 + 2.0 * jax.random.normal(kx1, (N_HALF, IN_F), jnp.float32)
    x = jnp.concatenate([data0, data1], axis=0)            # (500, 2)

    # Deterministic parameter init (mimics nn.Linear uniform(-1/sqrt(in), ...))
    bound = 1.0 / jnp.sqrt(jnp.float32(IN_F))
    w = jax.random.uniform(kw, (OUT_F, IN_F), jnp.float32, -bound, bound)
    b = jax.random.uniform(kb, (OUT_F,), jnp.float32, -bound, bound)

    # tn=256 here so the small test still exercises a multi-step grid + padding;
    # for large batches the default tn=2048 gives big lane-dense tiles.
    out = net_forward(x, w, b, tn=256)
    out = jax.block_until_ready(out)

    # Sanity check against plain-JAX reference
    ref = jax.nn.sigmoid(x @ w.T + b)
    assert out.shape == ref.shape
    assert jnp.allclose(out, ref, atol=1e-5, rtol=1e-5)

    print("KERNEL_OK")
</pallas_src>

<mosaic_0001>
module attributes {stable_mosaic.version = 11 : i64} {
  func.func @_linear_sigmoid_kernel(%arg0: i32, %arg1: memref<2x2xf32, #tpu.memory_space<smem>>, %arg2: memref<2xf32, #tpu.memory_space<smem>>, %arg3: memref<2x256xf32, #tpu.memory_space<vmem>>, %arg4: memref<2x256xf32, #tpu.memory_space<vmem>>) attributes {dimension_semantics = [#tpu.dimension_semantics<parallel>], iteration_bounds = array<i64: 2>, scalar_prefetch = 0 : i64, scratch_operands = 0 : i64, tpu.core_type = #tpu.core_type<tc>, window_params = [{transform_indices = @transform_0, window_bounds = array<i64: 2, 2>}, {transform_indices = @transform_1, window_bounds = array<i64: 2>}, {transform_indices = @transform_2, window_bounds = array<i64: 2, 256>}, {transform_indices = @transform_3, window_bounds = array<i64: 2, 256>}]} {
    %c0 = arith.constant 0 : index
    %c0_0 = arith.constant 0 : index
    %0 = memref.load %arg1[%c0, %c0_0] : memref<2x2xf32, #tpu.memory_space<smem>>
    %c0_1 = arith.constant 0 : index
    %c0_2 = arith.constant 0 : index
    %1 = vector.load %arg3[%c0_1, %c0_2] : memref<2x256xf32, #tpu.memory_space<vmem>>, vector<1x256xf32>
    %2 = vector.broadcast %0 : f32 to vector<1x256xf32>
    %3 = arith.mulf %2, %1 : vector<1x256xf32>
    %c0_3 = arith.constant 0 : index
    %c1 = arith.constant 1 : index
    %4 = memref.load %arg1[%c0_3, %c1] : memref<2x2xf32, #tpu.memory_space<smem>>
    %c1_4 = arith.constant 1 : index
    %c0_5 = arith.constant 0 : index
    %5 = vector.load %arg3[%c1_4, %c0_5] : memref<2x256xf32, #tpu.memory_space<vmem>>, vector<1x256xf32>
    %6 = vector.broadcast %4 : f32 to vector<1x256xf32>
    %7 = arith.mulf %6, %5 : vector<1x256xf32>
    %8 = arith.addf %3, %7 : vector<1x256xf32>
    %c0_6 = arith.constant 0 : index
    %9 = memref.load %arg2[%c0_6] : memref<2xf32, #tpu.memory_space<smem>>
    %10 = vector.broadcast %9 : f32 to vector<1x256xf32>
    %11 = arith.addf %8, %10 : vector<1x256xf32>
    %12 = arith.negf %11 : vector<1x256xf32>
    %13 = math.exp %12 : vector<1x256xf32>
    %cst = arith.constant 1.000000e+00 : f32
    %14 = vector.broadcast %cst : f32 to vector<1x256xf32>
    %15 = arith.addf %14, %13 : vector<1x256xf32>
    %16 = arith.divf %14, %15 : vector<1x256xf32>
    %c1_7 = arith.constant 1 : index
    %c0_8 = arith.constant 0 : index
    %17 = memref.load %arg1[%c1_7, %c0_8] : memref<2x2xf32, #tpu.memory_space<smem>>
    %c0_9 = arith.constant 0 : index
    %c0_10 = arith.constant 0 : index
    %18 = vector.load %arg3[%c0_9, %c0_10] : memref<2x256xf32, #tpu.memory_space<vmem>>, vector<1x256xf32>
    %19 = vector.broadcast %17 : f32 to vector<1x256xf32>
    %20 = arith.mulf %19, %18 : vector<1x256xf32>
    %c1_11 = arith.constant 1 : index
    %c1_12 = arith.constant 1 : index
    %21 = memref.load %arg1[%c1_11, %c1_12] : memref<2x2xf32, #tpu.memory_space<smem>>
    %c1_13 = arith.constant 1 : index
    %c0_14 = arith.constant 0 : index
    %22 = vector.load %arg3[%c1_13, %c0_14] : memref<2x256xf32, #tpu.memory_space<vmem>>, vector<1x256xf32>
    %23 = vector.broadcast %21 : f32 to vector<1x256xf32>
    %24 = arith.mulf %23, %22 : vector<1x256xf32>
    %25 = arith.addf %20, %24 : vector<1x256xf32>
    %c1_15 = arith.constant 1 : index
    %26 = memref.load %arg2[%c1_15] : memref<2xf32, #tpu.memory_space<smem>>
    %27 = vector.broadcast %26 : f32 to vector<1x256xf32>
    %28 = arith.addf %25, %27 : vector<1x256xf32>
    %29 = arith.negf %28 : vector<1x256xf32>
    %30 = math.exp %29 : vector<1x256xf32>
    %cst_16 = arith.constant 1.000000e+00 : f32
    %31 = vector.broadcast %cst_16 : f32 to vector<1x256xf32>
    %32 = arith.addf %31, %30 : vector<1x256xf32>
    %33 = arith.divf %31, %32 : vector<1x256xf32>
    %34 = tpu.concatenate %16, %33 in 0 : vector<1x256xf32>, vector<1x256xf32> -> vector<2x256xf32>
    %c0_17 = arith.constant 0 : index
    %c0_18 = arith.constant 0 : index
    %35 = vector.load %arg4[%c0_17, %c0_18] : memref<2x256xf32, #tpu.memory_space<vmem>>, vector<2x256xf32>
    tpu.vector_store %arg4[%c0_17, %c0_18], %34 {strides = array<i32>} : memref<2x256xf32, #tpu.memory_space<vmem>>, vector<2x256xf32>,
    return
  }
  func.func @transform_0(%arg0: i32) -> (i32, i32) {
    %c0_i32 = arith.constant 0 : i32
    %c0_i32_0 = arith.constant 0 : i32
    %c0_i32_1 = arith.constant 0 : i32
    return %c0_i32, %c0_i32_0 : i32, i32
  }
  func.func @transform_1(%arg0: i32) -> i32 {
    %c0_i32 = arith.constant 0 : i32
    %c0_i32_0 = arith.constant 0 : i32
    return %c0_i32 : i32
  }
  func.func @transform_2(%arg0: i32) -> (i32, i32) {
    %c0_i32 = arith.constant 0 : i32
    %c0_i32_0 = arith.constant 0 : i32
    return %c0_i32, %arg0 : i32, i32
  }
  func.func @transform_3(%arg0: i32) -> (i32, i32) {
    %c0_i32 = arith.constant 0 : i32
    %c0_i32_0 = arith.constant 0 : i32
    return %c0_i32, %arg0 : i32, i32
  }
}

</mosaic_0001>

<llo_original>
// kernel: tpu_custom_call.1
$region0: #{tpu_custom_call.1}
  #allocation0 [shape = 'u32[]', space=smem, size = 0x4, offset = 0x4, fixed_abs, tag = 'smem constant byte address 0x4 - core index']
  #allocation1 [shape = 'u32[72,128]{1,0:T(1,128)}', space=vmem, size = 0x9000, scoped, tag = 'internal scratch']
  %s0 = inlined_call_operand.hbm [shape: f32[2,2], index: 0, kind: input, shape index: {}]
  %s1 = inlined_call_operand.hbm [shape: f32[2], index: 1, kind: input, shape index: {}]
  %s2 = inlined_call_operand.hbm [shape: f32[2,512], index: 2, kind: input, shape index: {}]
  %s3 = inlined_call_operand.hbm [shape: f32[2,512], index: 3, kind: output, shape index: {}]
  %s4 = sld [smem:[#allocation0]]
  $region57: #{tpu_custom_call.1} parent=0
    _
  %s6 = ssub.s32 1, %s4
  %s7 = scalar_select 0, %s6, %s4
  $region1: #{tpu_custom_call.1} parent=0
    #allocation2 [shape = 'u8[1024]{0}', space=smem, size = 0x400, scoped, tag = 'input window, operand 0, single buffered']
    #allocation3 [shape = 's32[2]{0}', space=sflag, size = 0x8, scoped, tag = 'scoped memory for tpu_custom_call.1']
    #allocation4 [shape = 's32[2]{0}', space=sflag, size = 0x8, scoped, tag = 'scoped memory for tpu_custom_call.1']
    #allocation5 [shape = 's32[2]{0}', space=sflag, size = 0x8, scoped, tag = 'scoped memory for tpu_custom_call.1']
    #allocation6 [shape = 'u8[512]{0}', space=smem, size = 0x200, scoped, tag = 'input window, operand 1, single buffered']
    #allocation7 [shape = 's32[1]{0}', space=sflag, size = 0x4, scoped, tag = 'scoped memory for tpu_custom_call.1']
    #allocation8 [shape = 'u8[4096]{0}', space=vmem, size = 0x1000, scoped, tag = 'input window, operand 2']
    #allocation9 [shape = 'u8[4096]{0}', space=vmem, size = 0x1000, scoped, tag = 'output window, operand 0']
    %8 = vsyncpa [#allocation5], 0
    %9 = vsyncpa [#allocation7], 0
    %10 = vsyncpa [#allocation3], 0
    %s11 = scalar_lea.sflag [#allocation3], 1
    %12 = vsyncpa %s11, 0
    %13 = vsyncpa [#allocation4], 0
    %s14 = scalar_lea.sflag [#allocation4], 1
    %15 = vsyncpa %s14, 0
    loop: start=0, step=1, limit=4
    $region2: #{tpu_custom_call.1} parent=1 // loop_pre_header
      _
    $region3: #{tpu_custom_call.1} parent=1 // loop_header
      %s17 = sphi 0, %s21
      %p18 = scmp.ge.s32.totalorder %s17, 4
      %s25 = sphi 0, %s25
      %s27 = sphi 0, %s25
      %s28 = sphi 0, %s27
      %s42 = sphi 0, %s28
      %s46 = sphi 0, %s46
      %s48 = sphi 0, %s46
      %s49 = sphi 0, %s48
      %s63 = sphi 0, %s49
      %s69 = sphi 0, %s71
      %s72 = sphi 0, %s69
      %s73 = sphi 0, %s72
      %s89 = sphi 0, %s73
      %s95 = sphi 0, %s97
      %s98 = sphi 0, %s95
      %s99 = sphi 0, %s98
      %s115 = sphi 0, %s99
    $region4: #{tpu_custom_call.1} parent=1 // loop_header_branch
      %20 = sbr.rel (%p18) target = $region8
    $region5: #{tpu_custom_call.1} parent=1 // loop_body
      %s22 = ssub.s32 %s17, 1
      %s23 = ssub.s32 %s17, 2
      %s24 = sadd.s32 %s17, 1
      %s26 = sadd.s32 %s25, 1
      %p29 = scmp.eq.s32.totalorder %s17, 1
      %p30 = scmp.ne.s32.totalorder %s25, %s27
      %p31 = scmp.eq.s32.totalorder %s17, 0
      %p32 = por %p30, %p31
      %p33 = scmp.ne.s32.totalorder %s25, %s27
      %p34 = scmp.eq.s32.totalorder %s22, 1
      %p35 = por %p33, %p34
      %p36 = scmp.ne.s32.totalorder %s27, %s28
      %p37 = scmp.eq.s32.totalorder %s22, 0
      %p38 = por %p36, %p37
      %p39 = scmp.ne.s32.totalorder %s27, %s28
      %p40 = scmp.eq.s32.totalorder %s23, 1
      %p41 = por %p39, %p40
      %p43 = scmp.ne.s32.totalorder %s28, %s42
      %p44 = scmp.eq.s32.totalorder %s23, 0
      %p45 = por %p43, %p44
      %s47 = sadd.s32 %s46, 1
      %p50 = scmp.eq.s32.totalorder %s17, 1
      %p51 = scmp.ne.s32.totalorder %s46, %s48
      %p52 = scmp.eq.s32.totalorder %s17, 0
      %p53 = por %p51, %p52
      %p54 = scmp.ne.s32.totalorder %s46, %s48
      %p55 = scmp.eq.s32.totalorder %s22, 1
      %p56 = por %p54, %p55
      %p57 = scmp.ne.s32.totalorder %s48, %s49
      %p58 = scmp.eq.s32.totalorder %s22, 0
      %p59 = por %p57, %p58
      %p60 = scmp.ne.s32.totalorder %s48, %s49
      %p61 = scmp.eq.s32.totalorder %s23, 1
      %p62 = por %p60, %p61
      %p64 = scmp.ne.s32.totalorder %s49, %s63
      %p65 = scmp.eq.s32.totalorder %s23, 0
      %p66 = por %p64, %p65
      %s67 = ssub.s32 %s17, %s24
      %p68 = scmp.eq.s32.totalorder %s67, 0
      %s70 = sadd.s32 %s69, 1
      %s71 = scalar_select %p68, %s69, %s70
      %p74 = pneg %p68
      %p75 = scmp.eq.s32.totalorder %s17, 1
      %p76 = por %p74, %p75
      %p77 = scmp.ne.s32.totalorder %s69, %s72
      %p78 = scmp.eq.s32.totalorder %s17, 0
      %p79 = por %p77, %p78
      %p80 = scmp.ne.s32.totalorder %s69, %s72
      %p81 = scmp.eq.s32.totalorder %s22, 1
      %p82 = por %p80, %p81
      %p83 = scmp.ne.s32.totalorder %s72, %s73
      %p84 = scmp.eq.s32.totalorder %s22, 0
      %p85 = por %p83, %p84
      %p86 = scmp.ne.s32.totalorder %s72, %s73
      %p87 = scmp.eq.s32.totalorder %s23, 1
      %p88 = por %p86, %p87
      %p90 = scmp.ne.s32.totalorder %s73, %s89
      %p91 = scmp.eq.s32.totalorder %s23, 0
      %p92 = por %p90, %p91
      %s93 = ssub.s32 %s17, %s24
      %p94 = scmp.eq.s32.totalorder %s93, 0
      %s96 = sadd.s32 %s95, 1
      %s97 = scalar_select %p94, %s95, %s96
      %p100 = pneg %p94
      %p101 = scmp.eq.s32.totalorder %s17, 1
      %p102 = por %p100, %p101
      %p103 = scmp.ne.s32.totalorder %s95, %s98
      %p104 = scmp.eq.s32.totalorder %s17, 0
      %p105 = por %p103, %p104
      %p106 = scmp.ne.s32.totalorder %s95, %s98
      %p107 = scmp.eq.s32.totalorder %s22, 1
      %p108 = por %p106, %p107
      %p109 = scmp.ne.s32.totalorder %s98, %s99
      %p110 = scmp.eq.s32.totalorder %s22, 0
      %p111 = por %p109, %p110
      %p112 = scmp.ne.s32.totalorder %s98, %s99
      %p113 = scmp.eq.s32.totalorder %s23, 1
      %p114 = por %p112, %p113
      %p116 = scmp.ne.s32.totalorder %s99, %s115
      %p117 = scmp.eq.s32.totalorder %s23, 0
      %p118 = por %p116, %p117
      %p119 = scmp.le.s32.totalorder 1, %s17
      %p120 = scmp.lt.s32.totalorder %s17, 3
      %p121 = pnand %p119, %p120
      %p122 = pneg %p121
      // Predicated region
      $region9: #{tpu_custom_call.1} parent=5 // pred_check
        _
      $region10: #{tpu_custom_call.1} parent=5 // pred_check_branch
        %124 = sbr.rel (%p121) target = $region12
      $region11: #{tpu_custom_call.1} parent=5 // pred_region
        %s125 = ssub.s32 %s17, 1
        // Predicated region
        $region13: #{tpu_custom_call.1} parent=11 // pred_check
          %p126 = pneg %p38
        $region14: #{tpu_custom_call.1} parent=11 // pred_check_branch
          %128 = sbr.rel (%p126) target = $region16
        $region15: #{tpu_custom_call.1} parent=11 // pred_region
          %130 = vsyncadd [#allocation5], 0
          %s132 = sshll.u32 %s0, 4
          %s133 = int_to_ptr.hbm [resolvable:$true] %s132
          %135 = dma.hbm_to_smem %s133, 32, [#allocation2], [#allocation5]
        $region16: #{tpu_custom_call.1} parent=11 // pred_fallthru
          _
        // Predicated region
        $region17: #{tpu_custom_call.1} parent=11 // pred_check
          %p136 = pneg %p59
        $region18: #{tpu_custom_call.1} parent=11 // pred_check_branch
          %138 = sbr.rel (%p136) target = $region20
        $region19: #{tpu_custom_call.1} parent=11 // pred_region
          %140 = vsyncadd [#allocation7], 0
          %s142 = sshll.u32 %s1, 4
          %s143 = int_to_ptr.hbm [resolvable:$true] %s142
          %145 = dma.hbm_to_smem %s143, 16, [#allocation6], [#allocation7]
        $region20: #{tpu_custom_call.1} parent=11 // pred_fallthru
          _
      $region12: #{tpu_custom_call.1} parent=5 // pred_fallthru
        _
      %p146 = scmp.lt.s32.totalorder %s17, 2
      // Predicated region
      $region21: #{tpu_custom_call.1} parent=5 // pred_check
        %p147 = pneg %p146
      $region22: #{tpu_custom_call.1} parent=5 // pred_check_branch
        %149 = sbr.rel (%p147) target = $region24
      $region23: #{tpu_custom_call.1} parent=5 // pred_region
        // Predicated region
        $region25: #{tpu_custom_call.1} parent=23 // pred_check
          %p150 = pneg %p79
        $region26: #{tpu_custom_call.1} parent=23 // pred_check_branch
          %152 = sbr.rel (%p150) target = $region28
        $region27: #{tpu_custom_call.1} parent=23 // pred_region
          %s153 = sand.u32 %s69, 1
          %s154 = scalar_lea.sflag [#allocation3], %s153
          %s155 = sand.u32 %s69, 1
          %s156 = smul.addr %s155, 4
          %s157 = scalar_lea.vmem [#allocation8], %s156
          %s158 = smul.u32 2, %s17
          %160 = vsyncadd %s154, 0
          %s161 = smul.addr %s158, 2
          %s162 = scalar_lea.hbm %s2, %s161
          %s164 = sshll.u32 %s162, 4
          %s165 = int_to_ptr.hbm [resolvable:$true] %s164
          %s166 = sshll.u32 %s157, 4
          %s167 = int_to_ptr.vmem [resolvable:$true] %s166
          %169 = dma.hbm_to_vmem [thread:$0]  %s165, 64, %s167, %s154
        $region28: #{tpu_custom_call.1} parent=23 // pred_fallthru
          _
      $region24: #{tpu_custom_call.1} parent=5 // pred_fallthru
        _
      %p170 = scmp.le.s32.totalorder 1, %s17
      %p171 = scmp.lt.s32.totalorder %s17, 3
      %p172 = pnand %p170, %p171
      %p173 = pneg %p172
      // Predicated region
      $region29: #{tpu_custom_call.1} parent=5 // pred_check
        _
      $region30: #{tpu_custom_call.1} parent=5 // pred_check_branch
        %175 = sbr.rel (%p172) target = $region32
      $region31: #{tpu_custom_call.1} parent=5 // pred_region
        %s176 = ssub.s32 %s17, 1
        // Predicated region
        $region33: #{tpu_custom_call.1} parent=31 // pred_check
          %p177 = pneg %p38
        $region34: #{tpu_custom_call.1} parent=31 // pred_check_branch
          %179 = sbr.rel (%p177) target = $region36
        $region35: #{tpu_custom_call.1} parent=31 // pred_region
          %181 = dma.done [#allocation5], 32
        $region36: #{tpu_custom_call.1} parent=31 // pred_fallthru
          _
        // Predicated region
        $region37: #{tpu_custom_call.1} parent=31 // pred_check
          %p182 = pneg %p59
        $region38: #{tpu_custom_call.1} parent=31 // pred_check_branch
          %184 = sbr.rel (%p182) target = $region40
        $region39: #{tpu_custom_call.1} parent=31 // pred_region
          %186 = dma.done [#allocation7], 16
        $region40: #{tpu_custom_call.1} parent=31 // pred_fallthru
          _
        %s187 = sand.u32 %s72, 1
        %s188 = scalar_lea.sflag [#allocation3], %s187
        %s189 = sand.u32 %s72, 1
        %s190 = smul.addr %s189, 4
        %s191 = scalar_lea.vmem [#allocation8], %s190
        // Predicated region
        $region41: #{tpu_custom_call.1} parent=31 // pred_check
          %p192 = pneg %p85
        $region42: #{tpu_custom_call.1} parent=31 // pred_check_branch
          %194 = sbr.rel (%p192) target = $region44
        $region43: #{tpu_custom_call.1} parent=31 // pred_region
          %196 = dma.done %s188, 64
        $region44: #{tpu_custom_call.1} parent=31 // pred_fallthru
          _
        %197 = sfence
        %p198 = pneg %p38
        %p199 = pneg %p35
        %p200 = pneg %p59
        %p201 = pneg %p56
        %s202 = sand.u32 %s72, 1
        %s203 = scalar_lea.sflag [#allocation3], %s202
        %s204 = sand.u32 %s72, 1
        %s205 = smul.addr %s204, 4
        %s206 = scalar_lea.vmem [#allocation8], %s205
        %p207 = pneg %p85
        %p208 = pneg %p82
        %p209 = pneg %p111
        %p210 = pneg %p108
        %s211 = sand.u32 %s98, 1
        %s212 = scalar_lea.sflag [#allocation4], %s211
        %s213 = sand.u32 %s98, 1
        %s214 = smul.addr %s213, 4
        %s215 = scalar_lea.vmem [#allocation9], %s214
        %s216 = smul.u32 2, %s22
        %s217 = smul.u32 2, %s22
        %s218 = sld [smem:[#allocation2]]
        %v219 = vld [vmem:[%s191] ss:$2 sm:$0x3]
        %v220 = vstv %s218
        %v221 = vmul.f32 %v220, %v219
        %s222 = sld [smem:[#allocation2 + $0x1]]
        %s223 = scalar_lea.vmem %s191, 1 [#allocation8]
        %v224 = vld [vmem:[%s223] ss:$2 sm:$0x3]
        %v225 = vstv %s222
        %v226 = vmul.f32 %v225, %v224
        %v227 = vadd.f32 %v221, %v226
        %s228 = sld [smem:[#allocation6]]
        %v229 = vstv %s228
        %v230 = vadd.f32 %v227, %v229
        %v231 = vxor.u32 %v230, 2147483648
        %v232 = vmul.f32 %v231, 1.442695
        %v233 = vpow.pop %v232
        %v234 = vadd.f32 %v233, 1.0
        %v235 = vrcp.pop %v234
        %v236 = vmul.f32 %v234, %v235
        %v237 = vsub.f32 1.0, %v236
        %v238 = vmul.f32 %v235, %v237
        %v239 = vadd.f32 %v235, %v238
        %vm240 = vweird.f32 %v234
        %vm241 = vweird.f32 %v235
        %vm242 = vmor %vm240, %vm241
        %v243 = vsel %vm242, %v235, %v239
        %v244 = vand.u32 2147483647, %v234
        %vm245 = vcmp.eq.f32.partialorder %v244, 8.507059e+37
        %v246 = vand.u32 %v234, 2147483648
        %v247 = vor.u32 1.1754944e-38, %v246
        %v248 = vsel %vm245, %v247, %v243
        %v249 = vmul.f32 1.0, %v248
        %s250 = sld [smem:[#allocation2 + $0x80]]
        %v251 = vstv %s250
        %v252 = vmul.f32 %v251, %v219
        %s253 = sld [smem:[#allocation2 + $0x81]]
        %v254 = vstv %s253
        %v255 = vmul.f32 %v254, %v224
        %v256 = vadd.f32 %v252, %v255
        %s257 = sld [smem:[#allocation6 + $0x1]]
        %v258 = vstv %s257
        %v259 = vadd.f32 %v256, %v258
        %v260 = vxor.u32 %v259, 2147483648
        %v261 = vmul.f32 %v260, 1.442695
        %v262 = vpow.pop %v261
        %v263 = vadd.f32 %v262, 1.0
        %v264 = vrcp.pop %v263
        %v265 = vmul.f32 %v263, %v264
        %v266 = vsub.f32 1.0, %v265
        %v267 = vmul.f32 %v264, %v266
        %v268 = vadd.f32 %v264, %v267
        %vm269 = vweird.f32 %v263
        %vm270 = vweird.f32 %v264
        %vm271 = vmor %vm269, %vm270
        %v272 = vsel %vm271, %v264, %v268
        %v273 = vand.u32 2147483647, %v263
        %vm274 = vcmp.eq.f32.partialorder %v273, 8.507059e+37
        %v275 = vand.u32 %v263, 2147483648
        %v276 = vor.u32 1.1754944e-38, %v275
        %v277 = vsel %vm274, %v276, %v272
        %v278 = vmul.f32 1.0, %v277
        %v280 = vperm.slane %v249, 0
        %v281 = vperm.slane %v249, 1
        %v285 = vperm.slane %v278, 0
        %v286 = vperm.slane %v278, 1
        %vm289 = vcmask 1040384
        %v290 = vsel %vm289, %v280, %v285
        %v291 = vsel %vm289, %v281, %v286
        %v294 = vrot.slane %v291, 6
        %vm295 = vcmask 1041408
        %v296 = vsel %vm295, %v290, %v294
        %298 = vst [vmem:[%s215] sm:$0xf] %v296
        %s299 = sand.u32 %s98, 1
        %s300 = scalar_lea.sflag [#allocation4], %s299
        %s301 = sand.u32 %s98, 1
        %s302 = smul.addr %s301, 4
        %s303 = scalar_lea.vmem [#allocation9], %s302
        // Predicated region
        $region45: #{tpu_custom_call.1} parent=31 // pred_check
          %p304 = pneg %p108
        $region46: #{tpu_custom_call.1} parent=31 // pred_check_branch
          %306 = sbr.rel (%p304) target = $region48
        $region47: #{tpu_custom_call.1} parent=31 // pred_region
          %s307 = smul.u32 2, %s22
          %309 = vsyncadd %s300, 0
          %s310 = smul.addr %s307, 2
          %s311 = scalar_lea.hbm %s3, %s310
          %s313 = sshll.u32 %s303, 4
          %s314 = int_to_ptr.vmem [resolvable:$true] %s313
          %s315 = sshll.u32 %s311, 4
          %s316 = int_to_ptr.hbm [resolvable:$true] %s315
          %318 = dma.vmem_to_hbm [thread:$0]  %s314, 64, %s316, %s300
        $region48: #{tpu_custom_call.1} parent=31 // pred_fallthru
          _
      $region32: #{tpu_custom_call.1} parent=5 // pred_fallthru
        _
      %p319 = scmp.le.s32.totalorder 2, %s17
      // Predicated region
      $region49: #{tpu_custom_call.1} parent=5 // pred_check
        %p320 = pneg %p319
      $region50: #{tpu_custom_call.1} parent=5 // pred_check_branch
        %322 = sbr.rel (%p320) target = $region52
      $region51: #{tpu_custom_call.1} parent=5 // pred_region
        %s323 = ssub.s32 %s17, 2
        // Predicated region
        $region53: #{tpu_custom_call.1} parent=51 // pred_check
          %p324 = pneg %p114
        $region54: #{tpu_custom_call.1} parent=51 // pred_check_branch
          %326 = sbr.rel (%p324) target = $region56
        $region55: #{tpu_custom_call.1} parent=51 // pred_region
          %s327 = sand.u32 %s99, 1
          %s328 = scalar_lea.sflag [#allocation4], %s327
          %s329 = sand.u32 %s99, 1
          %s330 = smul.addr %s329, 4
          %s331 = scalar_lea.vmem [#allocation9], %s330
          %333 = dma.done %s328, 64
        $region56: #{tpu_custom_call.1} parent=51 // pred_fallthru
          _
      $region52: #{tpu_custom_call.1} parent=5 // pred_fallthru
        _
    $region6: #{tpu_custom_call.1} parent=1 // loop_footer
      %s21 = sadd.s32 1, %s17
    $region7: #{tpu_custom_call.1} parent=1 // loop_footer_branch
      %16 = sbr.rel target = $region3
    $region8: #{tpu_custom_call.1} parent=1 // loop_exit
      _
    %334 = vsyncpa [#allocation3], 1
    %s335 = scalar_lea.sflag [#allocation3], 1
    %336 = vsyncpa %s335, 1
    %337 = vsyncpa [#allocation4], 1
    %s338 = scalar_lea.sflag [#allocation4], 1
    %339 = vsyncpa %s338, 1
    %340 = vsyncpa [#allocation5], 1
    %s341 = scalar_lea.sflag [#allocation5], 1
    %342 = vsyncpa %s341, 1
    %343 = vsyncpa [#allocation7], 1

</llo_original>
